<compile_context>
chip_gen: v5e
topology: v5e:2x2
jax: 0.10.0
libtpu: 0.0.40
codegen_flags: <defaults>
</compile_context>

<pallas_src>
import functools

import jax
import jax.numpy as jnp
from jax.experimental import pallas as pl
from jax.experimental.pallas import tpu as pltpu

PAD = 128       # lane-dense padded feature width (multiple of 128)
NODE_PAD = 128  # node-axis padding multiple (lane/sublane-dense adjacency)


def _round_up(x, m):
    return (x + m - 1) // m * m


def _fused_sage_kernel(adj0_ref, adj1_ref, adj2_ref, x_ref,
                       w0_ref, b0_ref, w1_ref, b1_ref, w2_ref, b2_ref,
                       out_ref, *, fused_slab):
    """All three SAGE layers in one kernel; intermediates stay in VMEM/vregs."""
    adj_refs = (adj0_ref, adj1_ref, adj2_ref)
    w_refs = (w0_ref, w1_ref, w2_ref)
    b_refs = (b0_ref, b1_ref, b2_ref)
    n_layers = 3

    h = x_ref[...]  # f32 [Np, PAD], zero-padded beyond real nodes/features

    for l in range(n_layers):
        # Adjacency arrives f32 from HBM; cast to bf16 here on the VPU so the
        # dominant HBM traffic is read once at 4 B/elem (no wrapper astype).
        adj = adj_refs[l][...].astype(jnp.bfloat16)      # [Np, Np]
        w = w_refs[l][...]                               # bf16 [2*PAD, PAD] = [W_self; W_neigh]
        b = b_refs[l][...]                               # f32  [1, PAD] zero-padded
        hb = h.astype(jnp.bfloat16)                      # [Np, PAD]

        # Mean aggregation: row-normalized adjacency x features (f32 acc).
        hn = jnp.dot(adj, hb, preferred_element_type=jnp.float32)  # [Np, PAD]

        if fused_slab:
            # v6e/v7x (2x256^2 MXU): one K=2*PAD matmul fills a single MXU
            # pass.  Slab is built directly in bf16 (half the concat bytes).
            slab = jnp.concatenate([hb, hn.astype(jnp.bfloat16)], axis=-1)
            out = jnp.dot(slab, w, preferred_element_type=jnp.float32) + b
        else:
            # v4/v5e/v5p (128^2 MXU): K=256 is two passes regardless, so skip
            # the concat relayout and sum two K=PAD matmuls in f32.
            w_self = w[:PAD, :]
            w_neigh = w[PAD:, :]
            out = (jnp.dot(hb, w_self, preferred_element_type=jnp.float32)
                   + jnp.dot(hn.astype(jnp.bfloat16), w_neigh,
                             preferred_element_type=jnp.float32)
                   + b)

        if l != n_layers - 1:
            out = jnp.maximum(out, 0.0)   # ReLU (f32 epilogue)
            # TODO(synk): nn.Dropout(0.5) is the identity in eval mode; the
            # training-mode random mask is intentionally not applied here.
        h = out

    out_ref[...] = h


def init_sage_params(key, in_size, hid_size, out_size):
    """Deterministic init matching SAGEConv parameter shapes.

    fc_self / fc_neigh are Linear(in, out, bias=False); a single bias of
    shape (out,) is added afterwards.  Weights are stored as [in, out] so the
    kernel uses H @ W directly.
    """
    sizes = [(in_size, hid_size), (hid_size, hid_size), (hid_size, out_size)]
    params = []
    for fi, fo in sizes:
        key, k1, k2, k3 = jax.random.split(key, 4)
        scale = 1.0 / jnp.sqrt(jnp.float32(fi))
        w_self = jax.random.uniform(k1, (fi, fo), jnp.float32, -scale, scale)
        w_neigh = jax.random.uniform(k2, (fi, fo), jnp.float32, -scale, scale)
        b = jax.random.uniform(k3, (1, fo), jnp.float32, -scale, scale)
        params.append((w_self, w_neigh, b))
    return params


def pack_fused_params(params):
    """Zero-pad & pack per-layer weights into bf16 [2*PAD, PAD] = [W_self; W_neigh].

    The padded weight rows/cols are exactly zero, so padded feature lanes stay
    zero through bias, ReLU and all subsequent layers.
    """
    packed = []
    for w_self, w_neigh, b in params:
        fi, fo = w_self.shape
        assert fi <= PAD and fo <= PAD, (fi, fo)
        w = jnp.zeros((2 * PAD, PAD), jnp.float32)
        w = w.at[:fi, :fo].set(w_self)
        w = w.at[PAD:PAD + fi, :fo].set(w_neigh)
        bp = jnp.zeros((1, PAD), jnp.float32).at[0, :fo].set(b.reshape(-1))
        packed.append((w.astype(jnp.bfloat16), bp))
    return packed


def _prefers_fused_slab():
    """True on 256-wide-MXU chips (v6e/v7x); False on 128-wide MXUs."""
    try:
        kind = jax.devices()[0].device_kind.lower()
    except Exception:
        return True
    return not any(tag in kind for tag in ("v2", "v3", "v4", "v5"))


def sage_forward_padded(adjs, x, params, *, fused_slab=None):
    """forward(blocks, x): 3 fused SAGEConv layers, ReLU (+eval dropout) between.

    Returns the lane-dense padded output [Np, PAD]; the consumer slices
    [:N, :out_size] once (keeps the kernel's stores unmasked).
    """
    n = x.shape[0]
    in_size = params[0][0].shape[0]
    np_ = _round_up(max(n, 8), NODE_PAD)

    if fused_slab is None:
        fused_slab = _prefers_fused_slab()

    packed = pack_fused_params(params)

    # Node axis padded to a 128 multiple: full vregs and full-depth MXU
    # contraction for adj @ H.  Adjacency stays f32 (cast happens in-kernel);
    # padded adjacency rows/cols are zero, so padded nodes never contaminate
    # real rows and their outputs are sliced off.
    adjs_pad = [jnp.zeros((np_, np_), jnp.float32).at[:n, :n].set(a) for a in adjs]
    x_pad = jnp.zeros((np_, PAD), jnp.float32).at[:n, :in_size].set(x)

    inputs = [*adjs_pad, x_pad]
    for w, bp in packed:
        inputs.extend([w, bp])

    kernel = functools.partial(_fused_sage_kernel, fused_slab=fused_slab)
    vmem = pl.BlockSpec(memory_space=pltpu.MemorySpace.VMEM)

    # All-resident footprint (gridless, no double buffering).  Give the
    # compiler an explicit scoped-VMEM budget with headroom: the default is
    # only 16 MiB on v5e / 32 MiB on v6e/v7x.
    total_bytes = sum(int(a.size) * a.dtype.itemsize for a in inputs) + np_ * PAD * 4
    vmem_limit = int(min(max(2 * total_bytes, 16 << 20), 48 << 20))

    # TODO(synk): for graphs where the padded adjacency outgrows VMEM, switch
    # to a ("parallel", "arbitrary") grid over dst-row tiles: stream (TM, Np)
    # adjacency blocks from HBM (pl.Buffered(2-3)), keep H resident in VMEM
    # scratch across the layer loop, and halve TM on v7x (64 MiB VMEM, 2 TCs).
    out_pad = pl.pallas_call(
        kernel,
        out_shape=jax.ShapeDtypeStruct((np_, PAD), jnp.float32),
        in_specs=[vmem] * len(inputs),
        out_specs=vmem,
        compiler_params=pltpu.CompilerParams(vmem_limit_bytes=vmem_limit),
    )(*inputs)
    return out_pad


if __name__ == "__main__":
    key = jax.random.PRNGKey(0)
    N = 64          # number of graph nodes (same node set for every block)
    in_size, hid_size, out_size = 16, 32, 8

    ka, kx, kp = jax.random.split(key, 3)

    # Deterministic synthetic graph: sparse random edges + self loop so every
    # node has nonzero in-degree; row-normalize to get the 'mean' aggregator.
    adj_raw = (jax.random.uniform(ka, (N, N)) < 0.15).astype(jnp.float32)
    adj_raw = adj_raw.at[jnp.arange(N), jnp.arange(N)].set(1.0)
    deg = jnp.maximum(adj_raw.sum(axis=1, keepdims=True), 1.0)
    adj = adj_raw / deg

    x = jax.random.normal(kx, (N, in_size), dtype=jnp.float32)
    params = init_sage_params(kp, in_size, hid_size, out_size)

    # "blocks": one (full-neighbor) block per layer; here they share the graph.
    adjs = [adj, adj, adj]

    out_pad = sage_forward_padded(adjs, x, params)
    jax.block_until_ready(out_pad)
    out = out_pad[:N, :out_size]   # single slice at the consumer
    assert out.shape == (N, out_size), out.shape

    # Pure-JAX f32 reference (loose tolerance: kernel matmuls run in bf16).
    h = x
    for l, (w_self, w_neigh, b) in enumerate(params):
        hn = adj @ h
        h = h @ w_self + hn @ w_neigh + b
        if l != len(params) - 1:
            h = jnp.maximum(h, 0.0)
    max_diff = float(jnp.max(jnp.abs(out - h)))
    assert max_diff < 0.25, max_diff

    print("KERNEL_OK")
</pallas_src>

<mosaic_0001>
module attributes {stable_mosaic.version = 11 : i64} {
  func.func @_fused_sage_kernel(%arg0: memref<128x128xf32, #tpu.memory_space<vmem>>, %arg1: memref<128x128xf32, #tpu.memory_space<vmem>>, %arg2: memref<128x128xf32, #tpu.memory_space<vmem>>, %arg3: memref<128x128xf32, #tpu.memory_space<vmem>>, %arg4: memref<256x128xbf16, #tpu.memory_space<vmem>>, %arg5: memref<1x128xf32, #tpu.memory_space<vmem>>, %arg6: memref<256x128xbf16, #tpu.memory_space<vmem>>, %arg7: memref<1x128xf32, #tpu.memory_space<vmem>>, %arg8: memref<256x128xbf16, #tpu.memory_space<vmem>>, %arg9: memref<1x128xf32, #tpu.memory_space<vmem>>, %arg10: memref<128x128xf32, #tpu.memory_space<vmem>>) attributes {dimension_semantics = [], scalar_prefetch = 0 : i64, scratch_operands = 0 : i64, tpu.core_type = #tpu.core_type<tc>} {
    %c0 = arith.constant 0 : index
    %c0_0 = arith.constant 0 : index
    %0 = vector.load %arg3[%c0, %c0_0] : memref<128x128xf32, #tpu.memory_space<vmem>>, vector<128x128xf32>
    %c0_1 = arith.constant 0 : index
    %c0_2 = arith.constant 0 : index
    %1 = vector.load %arg0[%c0_1, %c0_2] : memref<128x128xf32, #tpu.memory_space<vmem>>, vector<128x128xf32>
    %2 = arith.truncf %1 : vector<128x128xf32> to vector<128x128xbf16>
    %c0_3 = arith.constant 0 : index
    %c0_4 = arith.constant 0 : index
    %3 = vector.load %arg4[%c0_3, %c0_4] : memref<256x128xbf16, #tpu.memory_space<vmem>>, vector<256x128xbf16>
    %c0_5 = arith.constant 0 : index
    %c0_6 = arith.constant 0 : index
    %4 = vector.load %arg5[%c0_5, %c0_6] : memref<1x128xf32, #tpu.memory_space<vmem>>, vector<1x128xf32>
    %5 = arith.truncf %0 : vector<128x128xf32> to vector<128x128xbf16>
    %cst = arith.constant dense<0.000000e+00> : vector<128x128xf32>
    %6 = tpu.matmul %2, %5, %cst {dimension_numbers = #tpu.dot_dimension_numbers<[1], [0], [0], [1], [0, 0, 1, 1], [], []>} : vector<128x128xbf16>, vector<128x128xbf16>, vector<128x128xf32> -> vector<128x128xf32>
    %7 = arith.truncf %6 : vector<128x128xf32> to vector<128x128xbf16>
    %8 = tpu.concatenate %5, %7 in 1 : vector<128x128xbf16>, vector<128x128xbf16> -> vector<128x256xbf16>
    %cst_7 = arith.constant dense<0.000000e+00> : vector<128x128xf32>
    %9 = tpu.matmul %8, %3, %cst_7 {dimension_numbers = #tpu.dot_dimension_numbers<[1], [0], [0], [1], [0, 0, 1, 1], [], []>} : vector<128x256xbf16>, vector<256x128xbf16>, vector<128x128xf32> -> vector<128x128xf32>
    %10 = vector.broadcast %4 : vector<1x128xf32> to vector<128x128xf32>
    %11 = arith.addf %9, %10 : vector<128x128xf32>
    %cst_8 = arith.constant 0.000000e+00 : f32
    %12 = vector.broadcast %cst_8 : f32 to vector<128x128xf32>
    %13 = arith.maximumf %11, %12 : vector<128x128xf32>
    %c0_9 = arith.constant 0 : index
    %c0_10 = arith.constant 0 : index
    %14 = vector.load %arg1[%c0_9, %c0_10] : memref<128x128xf32, #tpu.memory_space<vmem>>, vector<128x128xf32>
    %15 = arith.truncf %14 : vector<128x128xf32> to vector<128x128xbf16>
    %c0_11 = arith.constant 0 : index
    %c0_12 = arith.constant 0 : index
    %16 = vector.load %arg6[%c0_11, %c0_12] : memref<256x128xbf16, #tpu.memory_space<vmem>>, vector<256x128xbf16>
    %c0_13 = arith.constant 0 : index
    %c0_14 = arith.constant 0 : index
    %17 = vector.load %arg7[%c0_13, %c0_14] : memref<1x128xf32, #tpu.memory_space<vmem>>, vector<1x128xf32>
    %18 = arith.truncf %13 : vector<128x128xf32> to vector<128x128xbf16>
    %cst_15 = arith.constant dense<0.000000e+00> : vector<128x128xf32>
    %19 = tpu.matmul %15, %18, %cst_15 {dimension_numbers = #tpu.dot_dimension_numbers<[1], [0], [0], [1], [0, 0, 1, 1], [], []>} : vector<128x128xbf16>, vector<128x128xbf16>, vector<128x128xf32> -> vector<128x128xf32>
    %20 = arith.truncf %19 : vector<128x128xf32> to vector<128x128xbf16>
    %21 = tpu.concatenate %18, %20 in 1 : vector<128x128xbf16>, vector<128x128xbf16> -> vector<128x256xbf16>
    %cst_16 = arith.constant dense<0.000000e+00> : vector<128x128xf32>
    %22 = tpu.matmul %21, %16, %cst_16 {dimension_numbers = #tpu.dot_dimension_numbers<[1], [0], [0], [1], [0, 0, 1, 1], [], []>} : vector<128x256xbf16>, vector<256x128xbf16>, vector<128x128xf32> -> vector<128x128xf32>
    %23 = vector.broadcast %17 : vector<1x128xf32> to vector<128x128xf32>
    %24 = arith.addf %22, %23 : vector<128x128xf32>
    %cst_17 = arith.constant 0.000000e+00 : f32
    %25 = vector.broadcast %cst_17 : f32 to vector<128x128xf32>
    %26 = arith.maximumf %24, %25 : vector<128x128xf32>
    %c0_18 = arith.constant 0 : index
    %c0_19 = arith.constant 0 : index
    %27 = vector.load %arg2[%c0_18, %c0_19] : memref<128x128xf32, #tpu.memory_space<vmem>>, vector<128x128xf32>
    %28 = arith.truncf %27 : vector<128x128xf32> to vector<128x128xbf16>
    %c0_20 = arith.constant 0 : index
    %c0_21 = arith.constant 0 : index
    %29 = vector.load %arg8[%c0_20, %c0_21] : memref<256x128xbf16, #tpu.memory_space<vmem>>, vector<256x128xbf16>
    %c0_22 = arith.constant 0 : index
    %c0_23 = arith.constant 0 : index
    %30 = vector.load %arg9[%c0_22, %c0_23] : memref<1x128xf32, #tpu.memory_space<vmem>>, vector<1x128xf32>
    %31 = arith.truncf %26 : vector<128x128xf32> to vector<128x128xbf16>
    %cst_24 = arith.constant dense<0.000000e+00> : vector<128x128xf32>
    %32 = tpu.matmul %28, %31, %cst_24 {dimension_numbers = #tpu.dot_dimension_numbers<[1], [0], [0], [1], [0, 0, 1, 1], [], []>} : vector<128x128xbf16>, vector<128x128xbf16>, vector<128x128xf32> -> vector<128x128xf32>
    %33 = arith.truncf %32 : vector<128x128xf32> to vector<128x128xbf16>
    %34 = tpu.concatenate %31, %33 in 1 : vector<128x128xbf16>, vector<128x128xbf16> -> vector<128x256xbf16>
    %cst_25 = arith.constant dense<0.000000e+00> : vector<128x128xf32>
    %35 = tpu.matmul %34, %29, %cst_25 {dimension_numbers = #tpu.dot_dimension_numbers<[1], [0], [0], [1], [0, 0, 1, 1], [], []>} : vector<128x256xbf16>, vector<256x128xbf16>, vector<128x128xf32> -> vector<128x128xf32>
    %36 = vector.broadcast %30 : vector<1x128xf32> to vector<128x128xf32>
    %37 = arith.addf %35, %36 : vector<128x128xf32>
    %c0_26 = arith.constant 0 : index
    %c0_27 = arith.constant 0 : index
    %38 = vector.load %arg10[%c0_26, %c0_27] : memref<128x128xf32, #tpu.memory_space<vmem>>, vector<128x128xf32>
    tpu.vector_store %arg10[%c0_26, %c0_27], %37 {strides = array<i32>} : memref<128x128xf32, #tpu.memory_space<vmem>>, vector<128x128xf32>,
    return
  }
}

</mosaic_0001>

<llo_original>
// kernel: tpu_custom_call.1
$region0: #{tpu_custom_call.1}
  #allocation0 [shape = 'u32[]', space=smem, size = 0x4, offset = 0x4, fixed_abs, tag = 'smem constant byte address 0x4 - core index']
  #allocation1 [shape = 'u32[72,128]{1,0:T(1,128)}', space=vmem, size = 0x9000, scoped, tag = 'internal scratch']
  %s0 = inlined_call_operand.hbm [shape: f32[128,128], index: 0, kind: input, shape index: {}]
  %s1 = inlined_call_operand.hbm [shape: f32[128,128], index: 1, kind: input, shape index: {}]
  %s2 = inlined_call_operand.hbm [shape: f32[128,128], index: 2, kind: input, shape index: {}]
  %s3 = inlined_call_operand.hbm [shape: f32[128,128], index: 3, kind: input, shape index: {}]
  %s4 = inlined_call_operand.hbm [shape: bf16[256,128], index: 4, kind: input, shape index: {}]
  %s5 = inlined_call_operand.vmem [shape: f32[1,128], index: 5, kind: input, shape index: {}]
  %s6 = inlined_call_operand.hbm [shape: bf16[256,128], index: 6, kind: input, shape index: {}]
  %s7 = inlined_call_operand.vmem [shape: f32[1,128], index: 7, kind: input, shape index: {}]
  %s8 = inlined_call_operand.hbm [shape: bf16[256,128], index: 8, kind: input, shape index: {}]
  %s9 = inlined_call_operand.vmem [shape: f32[1,128], index: 9, kind: input, shape index: {}]
  %s10 = inlined_call_operand.hbm [shape: f32[128,128], index: 10, kind: output, shape index: {}]
  %s11 = sld [smem:[#allocation0]]
  $region78: #{tpu_custom_call.1} parent=0
    _
  %s13 = ssub.s32 1, %s11
  %s14 = scalar_select 0, %s13, %s11
  $region1: #{tpu_custom_call.1} parent=0
    #allocation2 [shape = 'u8[65536]{0}', space=vmem, size = 0x10000, scoped, tag = 'input window, operand 0, single buffered']
    #allocation3 [shape = 's32[1]{0}', space=sflag, size = 0x4, scoped, tag = 'scoped memory for tpu_custom_call.1']
    #allocation4 [shape = 's32[1]{0}', space=sflag, size = 0x4, scoped, tag = 'scoped memory for tpu_custom_call.1']
    #allocation5 [shape = 'u8[65536]{0}', space=vmem, size = 0x10000, scoped, tag = 'input window, operand 1, single buffered']
    #allocation6 [shape = 's32[1]{0}', space=sflag, size = 0x4, scoped, tag = 'scoped memory for tpu_custom_call.1']
    #allocation7 [shape = 'u8[65536]{0}', space=vmem, size = 0x10000, scoped, tag = 'input window, operand 2, single buffered']
    #allocation8 [shape = 'u8[65536]{0}', space=vmem, size = 0x10000, scoped, tag = 'input window, operand 3, single buffered']
    #allocation9 [shape = 's32[1]{0}', space=sflag, size = 0x4, scoped, tag = 'scoped memory for tpu_custom_call.1']
    #allocation10 [shape = 'u8[65536]{0}', space=vmem, size = 0x10000, scoped, tag = 'input window, operand 4, single buffered']
    #allocation11 [shape = 'u8[65536]{0}', space=vmem, size = 0x10000, scoped, tag = 'input window, operand 6, single buffered']
    #allocation12 [shape = 's32[1]{0}', space=sflag, size = 0x4, scoped, tag = 'scoped memory for tpu_custom_call.1']
    #allocation13 [shape = 'u8[65536]{0}', space=vmem, size = 0x10000, scoped, tag = 'input window, operand 8, single buffered']
    #allocation14 [shape = 'u8[65536]{0}', space=vmem, size = 0x10000, scoped, tag = 'output window, operand 0, single buffered']
    %15 = vsyncpa [#allocation3], 0
    %16 = vsyncpa [#allocation6], 0
    %17 = vsyncpa [#allocation9], 0
    %18 = vsyncpa [#allocation12], 0
    %19 = vsyncpa [#allocation4], 0
    // Predicated region
    $region2: #{tpu_custom_call.1} parent=1 // pred_check
      _
    $region3: #{tpu_custom_call.1} parent=1 // pred_check_branch
      %21 = sbr.rel (0) target = $region5
    $region4: #{tpu_custom_call.1} parent=1 // pred_region
      %23 = vsyncadd [#allocation3], 0
      %s24 = sshll.u32 %s0, 4
      %s25 = int_to_ptr.hbm [resolvable:$true] %s24
      %s26 = sshll.u32 [#allocation2], 4
      %s27 = int_to_ptr.vmem [resolvable:$true] %s26
      %32 = dma.hbm_to_vmem [thread:$0]  %s25, 2048, %s27, [#allocation3], 128, 128, 8
    $region5: #{tpu_custom_call.1} parent=1 // pred_fallthru
      _
    // Predicated region
    $region6: #{tpu_custom_call.1} parent=1 // pred_check
      _
    $region7: #{tpu_custom_call.1} parent=1 // pred_check_branch
      %34 = sbr.rel (0) target = $region9
    $region8: #{tpu_custom_call.1} parent=1 // pred_region
      %36 = vsyncadd [#allocation6], 0
      %s37 = sshll.u32 %s1, 4
      %s38 = int_to_ptr.hbm [resolvable:$true] %s37
      %s39 = sshll.u32 [#allocation5], 4
      %s40 = int_to_ptr.vmem [resolvable:$true] %s39
      %45 = dma.hbm_to_vmem [thread:$0]  %s38, 2048, %s40, [#allocation6], 128, 128, 8
    $region9: #{tpu_custom_call.1} parent=1 // pred_fallthru
      _
    // Predicated region
    $region10: #{tpu_custom_call.1} parent=1 // pred_check
      _
    $region11: #{tpu_custom_call.1} parent=1 // pred_check_branch
      %47 = sbr.rel (0) target = $region13
    $region12: #{tpu_custom_call.1} parent=1 // pred_region
      %49 = vsyncadd [#allocation6], 0
      %s50 = sshll.u32 %s2, 4
      %s51 = int_to_ptr.hbm [resolvable:$true] %s50
      %s52 = sshll.u32 [#allocation7], 4
      %s53 = int_to_ptr.vmem [resolvable:$true] %s52
      %58 = dma.hbm_to_vmem [thread:$0]  %s51, 2048, %s53, [#allocation6], 128, 128, 8
    $region13: #{tpu_custom_call.1} parent=1 // pred_fallthru
      _
    // Predicated region
    $region14: #{tpu_custom_call.1} parent=1 // pred_check
      _
    $region15: #{tpu_custom_call.1} parent=1 // pred_check_branch
      %60 = sbr.rel (0) target = $region17
    $region16: #{tpu_custom_call.1} parent=1 // pred_region
      %62 = vsyncadd [#allocation9], 0
      %s63 = sshll.u32 %s3, 4
      %s64 = int_to_ptr.hbm [resolvable:$true] %s63
      %s65 = sshll.u32 [#allocation8], 4
      %s66 = int_to_ptr.vmem [resolvable:$true] %s65
      %71 = dma.hbm_to_vmem [thread:$0]  %s64, 2048, %s66, [#allocation9], 128, 128, 8
    $region17: #{tpu_custom_call.1} parent=1 // pred_fallthru
      _
    // Predicated region
    $region18: #{tpu_custom_call.1} parent=1 // pred_check
      _
    $region19: #{tpu_custom_call.1} parent=1 // pred_check_branch
      %73 = sbr.rel (0) target = $region21
    $region20: #{tpu_custom_call.1} parent=1 // pred_region
      %75 = vsyncadd [#allocation9], 0
      %s76 = sshll.u32 %s4, 4
      %s77 = int_to_ptr.hbm [resolvable:$true] %s76
      %s78 = sshll.u32 [#allocation10], 4
      %s79 = int_to_ptr.vmem [resolvable:$true] %s78
      %84 = dma.hbm_to_vmem [thread:$0]  %s77, 2048, %s79, [#allocation9], 64, 64, 4
    $region21: #{tpu_custom_call.1} parent=1 // pred_fallthru
      _
    // Predicated region
    $region22: #{tpu_custom_call.1} parent=1 // pred_check
      _
    $region23: #{tpu_custom_call.1} parent=1 // pred_check_branch
      %86 = sbr.rel (0) target = $region25
    $region24: #{tpu_custom_call.1} parent=1 // pred_region
      _
    $region25: #{tpu_custom_call.1} parent=1 // pred_fallthru
      _
    // Predicated region
    $region26: #{tpu_custom_call.1} parent=1 // pred_check
      _
    $region27: #{tpu_custom_call.1} parent=1 // pred_check_branch
      %88 = sbr.rel (0) target = $region29
    $region28: #{tpu_custom_call.1} parent=1 // pred_region
      %90 = vsyncadd [#allocation12], 0
      %s91 = sshll.u32 %s6, 4
      %s92 = int_to_ptr.hbm [resolvable:$true] %s91
      %s93 = sshll.u32 [#allocation11], 4
      %s94 = int_to_ptr.vmem [resolvable:$true] %s93
      %99 = dma.hbm_to_vmem [thread:$0]  %s92, 2048, %s94, [#allocation12], 64, 64, 4
    $region29: #{tpu_custom_call.1} parent=1 // pred_fallthru
      _
    // Predicated region
    $region30: #{tpu_custom_call.1} parent=1 // pred_check
      _
    $region31: #{tpu_custom_call.1} parent=1 // pred_check_branch
      %101 = sbr.rel (0) target = $region33
    $region32: #{tpu_custom_call.1} parent=1 // pred_region
      _
    $region33: #{tpu_custom_call.1} parent=1 // pred_fallthru
      _
    // Predicated region
    $region34: #{tpu_custom_call.1} parent=1 // pred_check
      _
    $region35: #{tpu_custom_call.1} parent=1 // pred_check_branch
      %103 = sbr.rel (0) target = $region37
    $region36: #{tpu_custom_call.1} parent=1 // pred_region
      %105 = vsyncadd [#allocation12], 0
      %s106 = sshll.u32 %s8, 4
      %s107 = int_to_ptr.hbm [resolvable:$true] %s106
      %s108 = sshll.u32 [#allocation13], 4
      %s109 = int_to_ptr.vmem [resolvable:$true] %s108
      %114 = dma.hbm_to_vmem [thread:$0]  %s107, 2048, %s109, [#allocation12], 64, 64, 4
    $region37: #{tpu_custom_call.1} parent=1 // pred_fallthru
      _
    // Predicated region
    $region38: #{tpu_custom_call.1} parent=1 // pred_check
      _
    $region39: #{tpu_custom_call.1} parent=1 // pred_check_branch
      %116 = sbr.rel (0) target = $region41
    $region40: #{tpu_custom_call.1} parent=1 // pred_region
      _
    $region41: #{tpu_custom_call.1} parent=1 // pred_fallthru
      _
    // Predicated region
    $region42: #{tpu_custom_call.1} parent=1 // pred_check
      _
    $region43: #{tpu_custom_call.1} parent=1 // pred_check_branch
      %118 = sbr.rel (0) target = $region45
    $region44: #{tpu_custom_call.1} parent=1 // pred_region
      %120 = dma.done [#allocation3], 2048
    $region45: #{tpu_custom_call.1} parent=1 // pred_fallthru
      _
    // Predicated region
    $region46: #{tpu_custom_call.1} parent=1 // pred_check
      _
    $region47: #{tpu_custom_call.1} parent=1 // pred_check_branch
      %122 = sbr.rel (0) target = $region49
    $region48: #{tpu_custom_call.1} parent=1 // pred_region
      %124 = dma.done [#allocation6], 2048
    $region49: #{tpu_custom_call.1} parent=1 // pred_fallthru
      _
    // Predicated region
    $region50: #{tpu_custom_call.1} parent=1 // pred_check
      _
    $region51: #{tpu_custom_call.1} parent=1 // pred_check_branch
      %126 = sbr.rel (0) target = $region53
    $region52: #{tpu_custom_call.1} parent=1 // pred_region
      %128 = dma.done [#allocation6], 2048
    $region53: #{tpu_custom_call.1} parent=1 // pred_fallthru
      _
    // Predicated region
    $region54: #{tpu_custom_call.1} parent=1 // pred_check
      _
    $region55: #{tpu_custom_call.1} parent=1 // pred_check_branch
      %130 = sbr.rel (0) target = $region57
    $region56: #{tpu_custom_call.1} parent=1 // pred_region
      %132 = dma.done [#allocation9], 2048
    $region57: #{tpu_custom_call.1} parent=1 // pred_fallthru
      _
    // Predicated region
    $region58: #{tpu_custom_call.1} parent=1 // pred_check
      _
    $region59: #{tpu_custom_call.1} parent=1 // pred_check_branch
      %134 = sbr.rel (0) target = $region61
    $region60: #{tpu_custom_call.1} parent=1 // pred_region
      %136 = dma.done [#allocation9], 2048
    $region61: #{tpu_custom_call.1} parent=1 // pred_fallthru
      _
    // Predicated region
    $region62: #{tpu_custom_call.1} parent=1 // pred_check
      _
    $region63: #{tpu_custom_call.1} parent=1 // pred_check_branch
      %138 = sbr.rel (0) target = $region65
    $region64: #{tpu_custom_call.1} parent=1 // pred_region
      %140 = dma.done [#allocation12], 2048
    $region65: #{tpu_custom_call.1} parent=1 // pred_fallthru
      _
    // Predicated region
    $region66: #{tpu_custom_call.1} parent=1 // pred_check
      _
    $region67: #{tpu_custom_call.1} parent=1 // pred_check_branch
      %142 = sbr.rel (0) target = $region69
    $region68: #{tpu_custom_call.1} parent=1 // pred_region
      %144 = dma.done [#allocation12], 2048
    $region69: #{tpu_custom_call.1} parent=1 // pred_fallthru
      _
    %v145 = vld [vmem:[#allocation8] sm:$0xff]
    %v146 = vld [vmem:[#allocation8 + $0x8] sm:$0xff]
    %v147 = vld [vmem:[#allocation8 + $0x10] sm:$0xff]
    %v148 = vld [vmem:[#allocation8 + $0x18] sm:$0xff]
    %v149 = vld [vmem:[#allocation8 + $0x20] sm:$0xff]
    %v150 = vld [vmem:[#allocation8 + $0x28] sm:$0xff]
    %v151 = vld [vmem:[#allocation8 + $0x30] sm:$0xff]
    %v152 = vld [vmem:[#allocation8 + $0x38] sm:$0xff]
    %v153 = vld [vmem:[#allocation8 + $0x40] sm:$0xff]
    %v154 = vld [vmem:[#allocation8 + $0x48] sm:$0xff]
    %v155 = vld [vmem:[#allocation8 + $0x50] sm:$0xff]
    %v156 = vld [vmem:[#allocation8 + $0x58] sm:$0xff]
    %v157 = vld [vmem:[#allocation8 + $0x60] sm:$0xff]
    %v158 = vld [vmem:[#allocation8 + $0x68] sm:$0xff]
    %v159 = vld [vmem:[#allocation8 + $0x70] sm:$0xff]
    %v160 = vld [vmem:[#allocation8 + $0x78] sm:$0xff]
    %v161 = vld [vmem:[#allocation2] sm:$0xff]
    %v162 = vld [vmem:[#allocation2 + $0x8] sm:$0xff]
    %v163 = vld [vmem:[#allocation2 + $0x10] sm:$0xff]
    %v164 = vld [vmem:[#allocation2 + $0x18] sm:$0xff]
    %v165 = vld [vmem:[#allocation2 + $0x20] sm:$0xff]
    %v166 = vld [vmem:[#allocation2 + $0x28] sm:$0xff]
    %v167 = vld [vmem:[#allocation2 + $0x30] sm:$0xff]
    %v168 = vld [vmem:[#allocation2 + $0x38] sm:$0xff]
    %v169 = vld [vmem:[#allocation2 + $0x40] sm:$0xff]
    %v170 = vld [vmem:[#allocation2 + $0x48] sm:$0xff]
    %v171 = vld [vmem:[#allocation2 + $0x50] sm:$0xff]
    %v172 = vld [vmem:[#allocation2 + $0x58] sm:$0xff]
    %v173 = vld [vmem:[#allocation2 + $0x60] sm:$0xff]
    %v174 = vld [vmem:[#allocation2 + $0x68] sm:$0xff]
    %v175 = vld [vmem:[#allocation2 + $0x70] sm:$0xff]
    %v176 = vld [vmem:[#allocation2 + $0x78] sm:$0xff]
    %v177 = vpack.c.bf16 %v162, %v161
    %v178 = vpack.c.bf16 %v164, %v163
    %v179 = vpack.c.bf16 %v166, %v165
    %v180 = vpack.c.bf16 %v168, %v167
    %v181 = vpack.c.bf16 %v170, %v169
    %v182 = vpack.c.bf16 %v172, %v171
    %v183 = vpack.c.bf16 %v174, %v173
    %v184 = vpack.c.bf16 %v176, %v175
    %v185 = vld [vmem:[#allocation10] sm:$0xf]
    %v186 = vld [vmem:[#allocation10 + $0x4] sm:$0xf]
    %v187 = vld [vmem:[#allocation10 + $0x8] sm:$0xf]
    %v188 = vld [vmem:[#allocation10 + $0xc] sm:$0xf]
    %v189 = vld [vmem:[#allocation10 + $0x10] sm:$0xf]
    %v190 = vld [vmem:[#allocation10 + $0x14] sm:$0xf]
    %v191 = vld [vmem:[#allocation10 + $0x18] sm:$0xf]
    %v192 = vld [vmem:[#allocation10 + $0x1c] sm:$0xf]
    %v193 = vld [vmem:[#allocation10 + $0x20] sm:$0xf]
    %v194 = vld [vmem:[#allocation10 + $0x24] sm:$0xf]
    %v195 = vld [vmem:[#allocation10 + $0x28] sm:$0xf]
    %v196 = vld [vmem:[#allocation10 + $0x2c] sm:$0xf]
    %v197 = vld [vmem:[#allocation10 + $0x30] sm:$0xf]
    %v198 = vld [vmem:[#allocation10 + $0x34] sm:$0xf]
    %v199 = vld [vmem:[#allocation10 + $0x38] sm:$0xf]
    %v200 = vld [vmem:[#allocation10 + $0x3c] sm:$0xf]
    %v201 = vld [vmem:[#allocation10 + $0x40] sm:$0xf]
    %v202 = vld [vmem:[#allocation10 + $0x44] sm:$0xf]
    %v203 = vld [vmem:[#allocation10 + $0x48] sm:$0xf]
    %v204 = vld [vmem:[#allocation10 + $0x4c] sm:$0xf]
    %v205 = vld [vmem:[#allocation10 + $0x50] sm:$0xf]
    %v206 = vld [vmem:[#allocation10 + $0x54] sm:$0xf]
    %v207 = vld [vmem:[#allocation10 + $0x58] sm:$0xf]
    %v208 = vld [vmem:[#allocation10 + $0x5c] sm:$0xf]
    %v209 = vld [vmem:[#allocation10 + $0x60] sm:$0xf]
    %v210 = vld [vmem:[#allocation10 + $0x64] sm:$0xf]
    %v211 = vld [vmem:[#allocation10 + $0x68] sm:$0xf]
    %v212 = vld [vmem:[#allocation10 + $0x6c] sm:$0xf]
    %v213 = vld [vmem:[#allocation10 + $0x70] sm:$0xf]
    %v214 = vld [vmem:[#allocation10 + $0x74] sm:$0xf]
    %v215 = vld [vmem:[#allocation10 + $0x78] sm:$0xf]
    %v216 = vld [vmem:[#allocation10 + $0x7c] sm:$0xf]
    %v217 = vld [vmem:[%s5] sm:$0x1]
    %v218 = vpack.c.bf16 %v145, %v145
    %v219 = vpack.c.bf16 %v146, %v146
    %v220 = vpack.c.bf16 %v147, %v147
    %v221 = vpack.c.bf16 %v148, %v148
    %v222 = vpack.c.bf16 %v149, %v149
    %v223 = vpack.c.bf16 %v150, %v150
    %v224 = vpack.c.bf16 %v151, %v151
    %v225 = vpack.c.bf16 %v152, %v152
    %v226 = vpack.c.bf16 %v153, %v153
    %v227 = vpack.c.bf16 %v154, %v154
    %v228 = vpack.c.bf16 %v155, %v155
    %v229 = vpack.c.bf16 %v156, %v156
    %v230 = vpack.c.bf16 %v157, %v157
    %v231 = vpack.c.bf16 %v158, %v158
    %v232 = vpack.c.bf16 %v159, %v159
    %v233 = vpack.c.bf16 %v160, %v160
    %v250 = vunpack.c.l.b16 %v218
    %v251 = vunpack.c.l.b16 %v219
    %v252 = vunpack.c.l.b16 %v220
    %v253 = vunpack.c.l.b16 %v221
    %v254 = vunpack.c.l.b16 %v222
    %v255 = vunpack.c.l.b16 %v223
    %v256 = vunpack.c.l.b16 %v224
    %v257 = vunpack.c.l.b16 %v225
    %v258 = vunpack.c.l.b16 %v226
    %v259 = vunpack.c.l.b16 %v227
    %v260 = vunpack.c.l.b16 %v228
    %v261 = vunpack.c.l.b16 %v229
    %v262 = vunpack.c.l.b16 %v230
    %v263 = vunpack.c.l.b16 %v231
    %v264 = vunpack.c.l.b16 %v232
    %v265 = vunpack.c.l.b16 %v233
    %v266 = vpack.c.b16 %v251, %v250
    %v267 = vpack.c.b16 %v253, %v252
    %v268 = vpack.c.b16 %v255, %v254
    %v269 = vpack.c.b16 %v257, %v256
    %v270 = vpack.c.b16 %v259, %v258
    %v271 = vpack.c.b16 %v261, %v260
    %v272 = vpack.c.b16 %v263, %v262
    %v273 = vpack.c.b16 %v265, %v264
    %282 = vmatpush.bf16.msra.mxu0 %v273
    %283 = vmatpush.bf16.msra.mxu0 %v272
    %284 = vmatpush.bf16.msra.mxu0 %v271
    %285 = vmatpush.bf16.msra.mxu0 %v270
    %286 = vmatpush.bf16.msra.mxu0 %v269
    %287 = vmatpush.bf16.msra.mxu0 %v268
    %288 = vmatpush.bf16.msra.mxu0 %v267
    %289 = vmatpush.bf16.msra.mxu0 %v266
    %290 = vmatmul.bf16.gmra.mxu0 %v177
    %v291 = vpop.f32.mrf.mxu0
    %v292 = vadd.f32 0.0, %v291
    %v293 = vpop.f32.mrf.mxu0
    %v294 = vadd.f32 0.0, %v293
    %295 = vmatmul.bf16.gmra.mxu0 %v178
    %v296 = vpop.f32.mrf.mxu0
    %v297 = vadd.f32 0.0, %v296
    %v298 = vpop.f32.mrf.mxu0
    %v299 = vadd.f32 0.0, %v298
    %300 = vmatmul.bf16.gmra.mxu0 %v179
    %v301 = vpop.f32.mrf.mxu0
    %v302 = vadd.f32 0.0, %v301
    %v303 = vpop.f32.mrf.mxu0
    %v304 = vadd.f32 0.0, %v303
    %305 = vmatmul.bf16.gmra.mxu0 %v180
    %v306 = vpop.f32.mrf.mxu0
    %v307 = vadd.f32 0.0, %v306
    %v308 = vpop.f32.mrf.mxu0
    %v309 = vadd.f32 0.0, %v308
    %310 = vmatmul.bf16.gmra.mxu0 %v181
    %v311 = vpop.f32.mrf.mxu0
    %v312 = vadd.f32 0.0, %v311
    %v313 = vpop.f32.mrf.mxu0
    %v314 = vadd.f32 0.0, %v313
    %315 = vmatmul.bf16.gmra.mxu0 %v182
    %v316 = vpop.f32.mrf.mxu0
    %v317 = vadd.f32 0.0, %v316
    %v318 = vpop.f32.mrf.mxu0
    %v319 = vadd.f32 0.0, %v318
    %320 = vmatmul.bf16.gmra.mxu0 %v183
    %v321 = vpop.f32.mrf.mxu0
    %v322 = vadd.f32 0.0, %v321
    %v323 = vpop.f32.mrf.mxu0
    %v324 = vadd.f32 0.0, %v323
    %325 = vmatmul.bf16.gmra.mxu0 %v184
    %v326 = vpop.f32.mrf.mxu0
    %v327 = vadd.f32 0.0, %v326
    %v328 = vpop.f32.mrf.mxu0
    %v329 = vadd.f32 0.0, %v328
    %330 = vdwg.mxu0
    %v331 = vpack.c.bf16 %v292, %v292
    %v332 = vpack.c.bf16 %v294, %v294
    %v333 = vpack.c.bf16 %v297, %v297
    %v334 = vpack.c.bf16 %v299, %v299
    %v335 = vpack.c.bf16 %v302, %v302
    %v336 = vpack.c.bf16 %v304, %v304
    %v337 = vpack.c.bf16 %v307, %v307
    %v338 = vpack.c.bf16 %v309, %v309
    %v339 = vpack.c.bf16 %v312, %v312
    %v340 = vpack.c.bf16 %v314, %v314
    %v341 = vpack.c.bf16 %v317, %v317
    %v342 = vpack.c.bf16 %v319, %v319
    %v343 = vpack.c.bf16 %v322, %v322
    %v344 = vpack.c.bf16 %v324, %v324
    %v345 = vpack.c.bf16 %v327, %v327
    %v346 = vpack.c.bf16 %v329, %v329
    %v363 = vunpack.c.l.b16 %v331
    %v364 = vunpack.c.l.b16 %v332
    %v365 = vunpack.c.l.b16 %v333
    %v366 = vunpack.c.l.b16 %v334
    %v367 = vunpack.c.l.b16 %v335
    %v368 = vunpack.c.l.b16 %v336
    %v369 = vunpack.c.l.b16 %v337
    %v370 = vunpack.c.l.b16 %v338
    %v371 = vunpack.c.l.b16 %v339
    %v372 = vunpack.c.l.b16 %v340
    %v373 = vunpack.c.l.b16 %v341
    %v374 = vunpack.c.l.b16 %v342
    %v375 = vunpack.c.l.b16 %v343
    %v376 = vunpack.c.l.b16 %v344
    %v377 = vunpack.c.l.b16 %v345
    %v378 = vunpack.c.l.b16 %v346
    %v379 = vpack.c.b16 %v364, %v363
    %v380 = vpack.c.b16 %v366, %v365
    %v381 = vpack.c.b16 %v368, %v367
    %v382 = vpack.c.b16 %v370, %v369
    %v383 = vpack.c.b16 %v372, %v371
    %v384 = vpack.c.b16 %v374, %v373
    %v385 = vpack.c.b16 %v376, %v375
    %v386 = vpack.c.b16 %v378, %v377
    %v396 = vperm.slane %v217, 0
    %v430 = vunpack.c.l.b16 %v185
    %v431 = vunpack.c.l.b16 %v186
    %v432 = vunpack.c.l.b16 %v187
    %v433 = vunpack.c.l.b16 %v188
    %v434 = vunpack.c.l.b16 %v189
    %v435 = vunpack.c.l.b16 %v190
    %v436 = vunpack.c.l.b16 %v191
    %v437 = vunpack.c.l.b16 %v192
    %v438 = vunpack.c.l.b16 %v193
    %v439 = vunpack.c.l.b16 %v194
    %v440 = vunpack.c.l.b16 %v195
    %v441 = vunpack.c.l.b16 %v196
    %v442 = vunpack.c.l.b16 %v197
    %v443 = vunpack.c.l.b16 %v198
    %v444 = vunpack.c.l.b16 %v199
    %v445 = vunpack.c.l.b16 %v200
    %v446 = vunpack.c.l.b16 %v201
    %v447 = vunpack.c.l.b16 %v202
    %v448 = vunpack.c.l.b16 %v203
    %v449 = vunpack.c.l.b16 %v204
    %v450 = vunpack.c.l.b16 %v205
    %v451 = vunpack.c.l.b16 %v206
    %v452 = vunpack.c.l.b16 %v207
    %v453 = vunpack.c.l.b16 %v208
    %v454 = vunpack.c.l.b16 %v209
    %v455 = vunpack.c.l.b16 %v210
    %v456 = vunpack.c.l.b16 %v211
    %v457 = vunpack.c.l.b16 %v212
    %v458 = vunpack.c.l.b16 %v213
    %v459 = vunpack.c.l.b16 %v214
    %v460 = vunpack.c.l.b16 %v215
    %v461 = vunpack.c.l.b16 %v216
    %v462 = vpack.c.b16 %v431, %v430
    %v463 = vpack.c.b16 %v433, %v432
    %v464 = vpack.c.b16 %v435, %v434
    %v465 = vpack.c.b16 %v437, %v436
    %v466 = vpack.c.b16 %v439, %v438
    %v467 = vpack.c.b16 %v441, %v440
    %v468 = vpack.c.b16 %v443, %v442
    %v469 = vpack.c.b16 %v445, %v444
    %v470 = vpack.c.b16 %v447, %v446
    %v471 = vpack.c.b16 %v449, %v448
    %v472 = vpack.c.b16 %v451, %v450
    %v473 = vpack.c.b16 %v453, %v452
    %v474 = vpack.c.b16 %v455, %v454
    %v475 = vpack.c.b16 %v457, %v456
    %v476 = vpack.c.b16 %v459, %v458
    %v477 = vpack.c.b16 %v461, %v460
    %494 = vmatpush.bf16.msra.mxu0 %v469
    %495 = vmatpush.bf16.msra.mxu0 %v468
    %496 = vmatpush.bf16.msra.mxu0 %v467
    %497 = vmatpush.bf16.msra.mxu0 %v466
    %498 = vmatpush.bf16.msra.mxu0 %v465
    %499 = vmatpush.bf16.msra.mxu0 %v464
    %500 = vmatpush.bf16.msra.mxu0 %v463
    %501 = vmatpush.bf16.msra.mxu0 %v462
    %502 = vmatmul.bf16.gmra.mxu0 %v266
    %v503 = vpop.f32.mrf.mxu0
    %v504 = vadd.f32 %v396, %v503
    %v505 = vpop.f32.mrf.mxu0
    %v506 = vadd.f32 %v396, %v505
    %507 = vmatmul.bf16.gmra.mxu0 %v267
    %v508 = vpop.f32.mrf.mxu0
    %v509 = vadd.f32 %v396, %v508
    %v510 = vpop.f32.mrf.mxu0
    %v511 = vadd.f32 %v396, %v510
    %512 = vmatmul.bf16.gmra.mxu0 %v268
    %v513 = vpop.f32.mrf.mxu0
    %v514 = vadd.f32 %v396, %v513
    %v515 = vpop.f32.mrf.mxu0
    %v516 = vadd.f32 %v396, %v515
    %517 = vmatmul.bf16.gmra.mxu0 %v269
    %v518 = vpop.f32.mrf.mxu0
    %v519 = vadd.f32 %v396, %v518
    %v520 = vpop.f32.mrf.mxu0
    %v521 = vadd.f32 %v396, %v520
    %522 = vmatmul.bf16.gmra.mxu0 %v270
    %v523 = vpop.f32.mrf.mxu0
    %v524 = vadd.f32 %v396, %v523
    %v525 = vpop.f32.mrf.mxu0
    %v526 = vadd.f32 %v396, %v525
    %527 = vmatmul.bf16.gmra.mxu0 %v271
    %v528 = vpop.f32.mrf.mxu0
    %v529 = vadd.f32 %v396, %v528
    %v530 = vpop.f32.mrf.mxu0
    %v531 = vadd.f32 %v396, %v530
    %532 = vmatmul.bf16.gmra.mxu0 %v272
    %v533 = vpop.f32.mrf.mxu0
    %v534 = vadd.f32 %v396, %v533
    %v535 = vpop.f32.mrf.mxu0
    %v536 = vadd.f32 %v396, %v535
    %537 = vmatmul.bf16.gmra.mxu0 %v273
    %v538 = vpop.f32.mrf.mxu0
    %v539 = vadd.f32 %v396, %v538
    %v540 = vpop.f32.mrf.mxu0
    %v541 = vadd.f32 %v396, %v540
    %542 = vdwg.mxu0
    %543 = vmatpush.bf16.msra.mxu0 %v477
    %544 = vmatpush.bf16.msra.mxu0 %v476
    %545 = vmatpush.bf16.msra.mxu0 %v475
    %546 = vmatpush.bf16.msra.mxu0 %v474
    %547 = vmatpush.bf16.msra.mxu0 %v473
    %548 = vmatpush.bf16.msra.mxu0 %v472
    %549 = vmatpush.bf16.msra.mxu0 %v471
    %550 = vmatpush.bf16.msra.mxu0 %v470
    %551 = vmatmul.bf16.gmra.mxu0 %v379
    %v552 = vpop.f32.mrf.mxu0
    %v553 = vadd.f32 %v504, %v552
    %v554 = vpop.f32.mrf.mxu0
    %v555 = vadd.f32 %v506, %v554
    %556 = vmatmul.bf16.gmra.mxu0 %v380
    %v557 = vpop.f32.mrf.mxu0
    %v558 = vadd.f32 %v509, %v557
    %v559 = vpop.f32.mrf.mxu0
    %v560 = vadd.f32 %v511, %v559
    %561 = vmatmul.bf16.gmra.mxu0 %v381
    %v562 = vpop.f32.mrf.mxu0
    %v563 = vadd.f32 %v514, %v562
    %v564 = vpop.f32.mrf.mxu0
    %v565 = vadd.f32 %v516, %v564
    %566 = vmatmul.bf16.gmra.mxu0 %v382
    %v567 = vpop.f32.mrf.mxu0
    %v568 = vadd.f32 %v519, %v567
    %v569 = vpop.f32.mrf.mxu0
    %v570 = vadd.f32 %v521, %v569
    %571 = vmatmul.bf16.gmra.mxu0 %v383
    %v572 = vpop.f32.mrf.mxu0
    %v573 = vadd.f32 %v524, %v572
    %v574 = vpop.f32.mrf.mxu0
    %v575 = vadd.f32 %v526, %v574
    %576 = vmatmul.bf16.gmra.mxu0 %v384
    %v577 = vpop.f32.mrf.mxu0
    %v578 = vadd.f32 %v529, %v577
    %v579 = vpop.f32.mrf.mxu0
    %v580 = vadd.f32 %v531, %v579
    %581 = vmatmul.bf16.gmra.mxu0 %v385
    %v582 = vpop.f32.mrf.mxu0
    %v583 = vadd.f32 %v534, %v582
    %v584 = vpop.f32.mrf.mxu0
    %v585 = vadd.f32 %v536, %v584
    %586 = vmatmul.bf16.gmra.mxu0 %v386
    %v587 = vpop.f32.mrf.mxu0
    %v588 = vadd.f32 %v539, %v587
    %v589 = vpop.f32.mrf.mxu0
    %v590 = vadd.f32 %v541, %v589
    %591 = vdwg.mxu0
    %v592 = vmax.f32 %v553, 0.0
    %v593 = vmax.f32 %v555, 0.0
    %v594 = vmax.f32 %v558, 0.0
    %v595 = vmax.f32 %v560, 0.0
    %v596 = vmax.f32 %v563, 0.0
    %v597 = vmax.f32 %v565, 0.0
    %v598 = vmax.f32 %v568, 0.0
    %v599 = vmax.f32 %v570, 0.0
    %v600 = vmax.f32 %v573, 0.0
    %v601 = vmax.f32 %v575, 0.0
    %v602 = vmax.f32 %v578, 0.0
    %v603 = vmax.f32 %v580, 0.0
    %v604 = vmax.f32 %v583, 0.0
    %v605 = vmax.f32 %v585, 0.0
    %v606 = vmax.f32 %v588, 0.0
    %v607 = vmax.f32 %v590, 0.0
    %v608 = vld [vmem:[#allocation5] sm:$0xff]
    %v609 = vld [vmem:[#allocation5 + $0x8] sm:$0xff]
    %v610 = vld [vmem:[#allocation5 + $0x10] sm:$0xff]
    %v611 = vld [vmem:[#allocation5 + $0x18] sm:$0xff]
    %v612 = vld [vmem:[#allocation5 + $0x20] sm:$0xff]
    %v613 = vld [vmem:[#allocation5 + $0x28] sm:$0xff]
    %v614 = vld [vmem:[#allocation5 + $0x30] sm:$0xff]
    %v615 = vld [vmem:[#allocation5 + $0x38] sm:$0xff]
    %v616 = vld [vmem:[#allocation5 + $0x40] sm:$0xff]
    %v617 = vld [vmem:[#allocation5 + $0x48] sm:$0xff]
    %v618 = vld [vmem:[#allocation5 + $0x50] sm:$0xff]
    %v619 = vld [vmem:[#allocation5 + $0x58] sm:$0xff]
    %v620 = vld [vmem:[#allocation5 + $0x60] sm:$0xff]
    %v621 = vld [vmem:[#allocation5 + $0x68] sm:$0xff]
    %v622 = vld [vmem:[#allocation5 + $0x70] sm:$0xff]
    %v623 = vld [vmem:[#allocation5 + $0x78] sm:$0xff]
    %v624 = vpack.c.bf16 %v609, %v608
    %v625 = vpack.c.bf16 %v611, %v610
    %v626 = vpack.c.bf16 %v613, %v612
    %v627 = vpack.c.bf16 %v615, %v614
    %v628 = vpack.c.bf16 %v617, %v616
    %v629 = vpack.c.bf16 %v619, %v618
    %v630 = vpack.c.bf16 %v621, %v620
    %v631 = vpack.c.bf16 %v623, %v622
    %v632 = vld [vmem:[#allocation11] sm:$0xf]
    %v633 = vld [vmem:[#allocation11 + $0x4] sm:$0xf]
    %v634 = vld [vmem:[#allocation11 + $0x8] sm:$0xf]
    %v635 = vld [vmem:[#allocation11 + $0xc] sm:$0xf]
    %v636 = vld [vmem:[#allocation11 + $0x10] sm:$0xf]
    %v637 = vld [vmem:[#allocation11 + $0x14] sm:$0xf]
    %v638 = vld [vmem:[#allocation11 + $0x18] sm:$0xf]
    %v639 = vld [vmem:[#allocation11 + $0x1c] sm:$0xf]
    %v640 = vld [vmem:[#allocation11 + $0x20] sm:$0xf]
    %v641 = vld [vmem:[#allocation11 + $0x24] sm:$0xf]
    %v642 = vld [vmem:[#allocation11 + $0x28] sm:$0xf]
    %v643 = vld [vmem:[#allocation11 + $0x2c] sm:$0xf]
    %v644 = vld [vmem:[#allocation11 + $0x30] sm:$0xf]
    %v645 = vld [vmem:[#allocation11 + $0x34] sm:$0xf]
    %v646 = vld [vmem:[#allocation11 + $0x38] sm:$0xf]
    %v647 = vld [vmem:[#allocation11 + $0x3c] sm:$0xf]
    %v648 = vld [vmem:[#allocation11 + $0x40] sm:$0xf]
    %v649 = vld [vmem:[#allocation11 + $0x44] sm:$0xf]
    %v650 = vld [vmem:[#allocation11 + $0x48] sm:$0xf]
    %v651 = vld [vmem:[#allocation11 + $0x4c] sm:$0xf]
    %v652 = vld [vmem:[#allocation11 + $0x50] sm:$0xf]
    %v653 = vld [vmem:[#allocation11 + $0x54] sm:$0xf]
    %v654 = vld [vmem:[#allocation11 + $0x58] sm:$0xf]
    %v655 = vld [vmem:[#allocation11 + $0x5c] sm:$0xf]
    %v656 = vld [vmem:[#allocation11 + $0x60] sm:$0xf]
    %v657 = vld [vmem:[#allocation11 + $0x64] sm:$0xf]
    %v658 = vld [vmem:[#allocation11 + $0x68] sm:$0xf]
    %v659 = vld [vmem:[#allocation11 + $0x6c] sm:$0xf]
    %v660 = vld [vmem:[#allocation11 + $0x70] sm:$0xf]
    %v661 = vld [vmem:[#allocation11 + $0x74] sm:$0xf]
    %v662 = vld [vmem:[#allocation11 + $0x78] sm:$0xf]
    %v663 = vld [vmem:[#allocation11 + $0x7c] sm:$0xf]
    %v664 = vld [vmem:[%s7] sm:$0x1]
    %v665 = vpack.c.bf16 %v592, %v592
    %v666 = vpack.c.bf16 %v593, %v593
    %v667 = vpack.c.bf16 %v594, %v594
    %v668 = vpack.c.bf16 %v595, %v595
    %v669 = vpack.c.bf16 %v596, %v596
    %v670 = vpack.c.bf16 %v597, %v597
    %v671 = vpack.c.bf16 %v598, %v598
    %v672 = vpack.c.bf16 %v599, %v599
    %v673 = vpack.c.bf16 %v600, %v600
    %v674 = vpack.c.bf16 %v601, %v601
    %v675 = vpack.c.bf16 %v602, %v602
    %v676 = vpack.c.bf16 %v603, %v603
    %v677 = vpack.c.bf16 %v604, %v604
    %v678 = vpack.c.bf16 %v605, %v605
    %v679 = vpack.c.bf16 %v606, %v606
    %v680 = vpack.c.bf16 %v607, %v607
    %v697 = vunpack.c.l.b16 %v665
    %v698 = vunpack.c.l.b16 %v666
    %v699 = vunpack.c.l.b16 %v667
    %v700 = vunpack.c.l.b16 %v668
    %v701 = vunpack.c.l.b16 %v669
    %v702 = vunpack.c.l.b16 %v670
    %v703 = vunpack.c.l.b16 %v671
    %v704 = vunpack.c.l.b16 %v672
    %v705 = vunpack.c.l.b16 %v673
    %v706 = vunpack.c.l.b16 %v674
    %v707 = vunpack.c.l.b16 %v675
    %v708 = vunpack.c.l.b16 %v676
    %v709 = vunpack.c.l.b16 %v677
    %v710 = vunpack.c.l.b16 %v678
    %v711 = vunpack.c.l.b16 %v679
    %v712 = vunpack.c.l.b16 %v680
    %v713 = vpack.c.b16 %v698, %v697
    %v714 = vpack.c.b16 %v700, %v699
    %v715 = vpack.c.b16 %v702, %v701
    %v716 = vpack.c.b16 %v704, %v703
    %v717 = vpack.c.b16 %v706, %v705
    %v718 = vpack.c.b16 %v708, %v707
    %v719 = vpack.c.b16 %v710, %v709
    %v720 = vpack.c.b16 %v712, %v711
    %729 = vmatpush.bf16.msra.mxu0 %v720
    %730 = vmatpush.bf16.msra.mxu0 %v719
    %731 = vmatpush.bf16.msra.mxu0 %v718
    %732 = vmatpush.bf16.msra.mxu0 %v717
    %733 = vmatpush.bf16.msra.mxu0 %v716
    %734 = vmatpush.bf16.msra.mxu0 %v715
    %735 = vmatpush.bf16.msra.mxu0 %v714
    %736 = vmatpush.bf16.msra.mxu0 %v713
    %737 = vmatmul.bf16.gmra.mxu0 %v624
    %v738 = vpop.f32.mrf.mxu0
    %v739 = vadd.f32 0.0, %v738
    %v740 = vpop.f32.mrf.mxu0
    %v741 = vadd.f32 0.0, %v740
    %742 = vmatmul.bf16.gmra.mxu0 %v625
    %v743 = vpop.f32.mrf.mxu0
    %v744 = vadd.f32 0.0, %v743
    %v745 = vpop.f32.mrf.mxu0
    %v746 = vadd.f32 0.0, %v745
    %747 = vmatmul.bf16.gmra.mxu0 %v626
    %v748 = vpop.f32.mrf.mxu0
    %v749 = vadd.f32 0.0, %v748
    %v750 = vpop.f32.mrf.mxu0
    %v751 = vadd.f32 0.0, %v750
    %752 = vmatmul.bf16.gmra.mxu0 %v627
    %v753 = vpop.f32.mrf.mxu0
    %v754 = vadd.f32 0.0, %v753
    %v755 = vpop.f32.mrf.mxu0
    %v756 = vadd.f32 0.0, %v755
    %757 = vmatmul.bf16.gmra.mxu0 %v628
    %v758 = vpop.f32.mrf.mxu0
    %v759 = vadd.f32 0.0, %v758
    %v760 = vpop.f32.mrf.mxu0
    %v761 = vadd.f32 0.0, %v760
    %762 = vmatmul.bf16.gmra.mxu0 %v629
    %v763 = vpop.f32.mrf.mxu0
    %v764 = vadd.f32 0.0, %v763
    %v765 = vpop.f32.mrf.mxu0
    %v766 = vadd.f32 0.0, %v765
    %767 = vmatmul.bf16.gmra.mxu0 %v630
    %v768 = vpop.f32.mrf.mxu0
    %v769 = vadd.f32 0.0, %v768
    %v770 = vpop.f32.mrf.mxu0
    %v771 = vadd.f32 0.0, %v770
    %772 = vmatmul.bf16.gmra.mxu0 %v631
    %v773 = vpop.f32.mrf.mxu0
    %v774 = vadd.f32 0.0, %v773
    %v775 = vpop.f32.mrf.mxu0
    %v776 = vadd.f32 0.0, %v775
    %777 = vdwg.mxu0
    %v778 = vpack.c.bf16 %v739, %v739
    %v779 = vpack.c.bf16 %v741, %v741
    %v780 = vpack.c.bf16 %v744, %v744
    %v781 = vpack.c.bf16 %v746, %v746
    %v782 = vpack.c.bf16 %v749, %v749
    %v783 = vpack.c.bf16 %v751, %v751
    %v784 = vpack.c.bf16 %v754, %v754
    %v785 = vpack.c.bf16 %v756, %v756
    %v786 = vpack.c.bf16 %v759, %v759
    %v787 = vpack.c.bf16 %v761, %v761
    %v788 = vpack.c.bf16 %v764, %v764
    %v789 = vpack.c.bf16 %v766, %v766
    %v790 = vpack.c.bf16 %v769, %v769
    %v791 = vpack.c.bf16 %v771, %v771
    %v792 = vpack.c.bf16 %v774, %v774
    %v793 = vpack.c.bf16 %v776, %v776
    %v810 = vunpack.c.l.b16 %v778
    %v811 = vunpack.c.l.b16 %v779
    %v812 = vunpack.c.l.b16 %v780
    %v813 = vunpack.c.l.b16 %v781
    %v814 = vunpack.c.l.b16 %v782
    %v815 = vunpack.c.l.b16 %v783
    %v816 = vunpack.c.l.b16 %v784
    %v817 = vunpack.c.l.b16 %v785
    %v818 = vunpack.c.l.b16 %v786
    %v819 = vunpack.c.l.b16 %v787
    %v820 = vunpack.c.l.b16 %v788
    %v821 = vunpack.c.l.b16 %v789
    %v822 = vunpack.c.l.b16 %v790
    %v823 = vunpack.c.l.b16 %v791
    %v824 = vunpack.c.l.b16 %v792
    %v825 = vunpack.c.l.b16 %v793
    %v826 = vpack.c.b16 %v811, %v810
    %v827 = vpack.c.b16 %v813, %v812
    %v828 = vpack.c.b16 %v815, %v814
    %v829 = vpack.c.b16 %v817, %v816
    %v830 = vpack.c.b16 %v819, %v818
    %v831 = vpack.c.b16 %v821, %v820
    %v832 = vpack.c.b16 %v823, %v822
    %v833 = vpack.c.b16 %v825, %v824
    %v843 = vperm.slane %v664, 0
    %v877 = vunpack.c.l.b16 %v632
    %v878 = vunpack.c.l.b16 %v633
    %v879 = vunpack.c.l.b16 %v634
    %v880 = vunpack.c.l.b16 %v635
    %v881 = vunpack.c.l.b16 %v636
    %v882 = vunpack.c.l.b16 %v637
    %v883 = vunpack.c.l.b16 %v638
    %v884 = vunpack.c.l.b16 %v639
    %v885 = vunpack.c.l.b16 %v640
    %v886 = vunpack.c.l.b16 %v641
    %v887 = vunpack.c.l.b16 %v642
    %v888 = vunpack.c.l.b16 %v643
    %v889 = vunpack.c.l.b16 %v644
    %v890 = vunpack.c.l.b16 %v645
    %v891 = vunpack.c.l.b16 %v646
    %v892 = vunpack.c.l.b16 %v647
    %v893 = vunpack.c.l.b16 %v648
    %v894 = vunpack.c.l.b16 %v649
    %v895 = vunpack.c.l.b16 %v650
    %v896 = vunpack.c.l.b16 %v651
    %v897 = vunpack.c.l.b16 %v652
    %v898 = vunpack.c.l.b16 %v653
    %v899 = vunpack.c.l.b16 %v654
    %v900 = vunpack.c.l.b16 %v655
    %v901 = vunpack.c.l.b16 %v656
    %v902 = vunpack.c.l.b16 %v657
    %v903 = vunpack.c.l.b16 %v658
    %v904 = vunpack.c.l.b16 %v659
    %v905 = vunpack.c.l.b16 %v660
    %v906 = vunpack.c.l.b16 %v661
    %v907 = vunpack.c.l.b16 %v662
    %v908 = vunpack.c.l.b16 %v663
    %v909 = vpack.c.b16 %v878, %v877
    %v910 = vpack.c.b16 %v880, %v879
    %v911 = vpack.c.b16 %v882, %v881
    %v912 = vpack.c.b16 %v884, %v883
    %v913 = vpack.c.b16 %v886, %v885
    %v914 = vpack.c.b16 %v888, %v887
    %v915 = vpack.c.b16 %v890, %v889
    %v916 = vpack.c.b16 %v892, %v891
    %v917 = vpack.c.b16 %v894, %v893
    %v918 = vpack.c.b16 %v896, %v895
    %v919 = vpack.c.b16 %v898, %v897
    %v920 = vpack.c.b16 %v900, %v899
    %v921 = vpack.c.b16 %v902, %v901
    %v922 = vpack.c.b16 %v904, %v903
    %v923 = vpack.c.b16 %v906, %v905
    %v924 = vpack.c.b16 %v908, %v907
    %941 = vmatpush.bf16.msra.mxu0 %v916
    %942 = vmatpush.bf16.msra.mxu0 %v915
    %943 = vmatpush.bf16.msra.mxu0 %v914
    %944 = vmatpush.bf16.msra.mxu0 %v913
    %945 = vmatpush.bf16.msra.mxu0 %v912
    %946 = vmatpush.bf16.msra.mxu0 %v911
    %947 = vmatpush.bf16.msra.mxu0 %v910
    %948 = vmatpush.bf16.msra.mxu0 %v909
    %949 = vmatmul.bf16.gmra.mxu0 %v713
    %v950 = vpop.f32.mrf.mxu0
    %v951 = vadd.f32 %v843, %v950
    %v952 = vpop.f32.mrf.mxu0
    %v953 = vadd.f32 %v843, %v952
    %954 = vmatmul.bf16.gmra.mxu0 %v714
    %v955 = vpop.f32.mrf.mxu0
    %v956 = vadd.f32 %v843, %v955
    %v957 = vpop.f32.mrf.mxu0
    %v958 = vadd.f32 %v843, %v957
    %959 = vmatmul.bf16.gmra.mxu0 %v715
    %v960 = vpop.f32.mrf.mxu0
    %v961 = vadd.f32 %v843, %v960
    %v962 = vpop.f32.mrf.mxu0
    %v963 = vadd.f32 %v843, %v962
    %964 = vmatmul.bf16.gmra.mxu0 %v716
    %v965 = vpop.f32.mrf.mxu0
    %v966 = vadd.f32 %v843, %v965
    %v967 = vpop.f32.mrf.mxu0
    %v968 = vadd.f32 %v843, %v967
    %969 = vmatmul.bf16.gmra.mxu0 %v717
    %v970 = vpop.f32.mrf.mxu0
    %v971 = vadd.f32 %v843, %v970
    %v972 = vpop.f32.mrf.mxu0
    %v973 = vadd.f32 %v843, %v972
    %974 = vmatmul.bf16.gmra.mxu0 %v718
    %v975 = vpop.f32.mrf.mxu0
    %v976 = vadd.f32 %v843, %v975
    %v977 = vpop.f32.mrf.mxu0
    %v978 = vadd.f32 %v843, %v977
    %979 = vmatmul.bf16.gmra.mxu0 %v719
    %v980 = vpop.f32.mrf.mxu0
    %v981 = vadd.f32 %v843, %v980
    %v982 = vpop.f32.mrf.mxu0
    %v983 = vadd.f32 %v843, %v982
    %984 = vmatmul.bf16.gmra.mxu0 %v720
    %v985 = vpop.f32.mrf.mxu0
    %v986 = vadd.f32 %v843, %v985
    %v987 = vpop.f32.mrf.mxu0
    %v988 = vadd.f32 %v843, %v987
    %989 = vdwg.mxu0
    %990 = vmatpush.bf16.msra.mxu0 %v924
    %991 = vmatpush.bf16.msra.mxu0 %v923
    %992 = vmatpush.bf16.msra.mxu0 %v922
    %993 = vmatpush.bf16.msra.mxu0 %v921
    %994 = vmatpush.bf16.msra.mxu0 %v920
    %995 = vmatpush.bf16.msra.mxu0 %v919
    %996 = vmatpush.bf16.msra.mxu0 %v918
    %997 = vmatpush.bf16.msra.mxu0 %v917
    %998 = vmatmul.bf16.gmra.mxu0 %v826
    %v999 = vpop.f32.mrf.mxu0
    %v1000 = vadd.f32 %v951, %v999
    %v1001 = vpop.f32.mrf.mxu0
    %v1002 = vadd.f32 %v953, %v1001
    %1003 = vmatmul.bf16.gmra.mxu0 %v827
    %v1004 = vpop.f32.mrf.mxu0
    %v1005 = vadd.f32 %v956, %v1004
    %v1006 = vpop.f32.mrf.mxu0
    %v1007 = vadd.f32 %v958, %v1006
    %1008 = vmatmul.bf16.gmra.mxu0 %v828
    %v1009 = vpop.f32.mrf.mxu0
    %v1010 = vadd.f32 %v961, %v1009
    %v1011 = vpop.f32.mrf.mxu0
    %v1012 = vadd.f32 %v963, %v1011
    %1013 = vmatmul.bf16.gmra.mxu0 %v829
    %v1014 = vpop.f32.mrf.mxu0
    %v1015 = vadd.f32 %v966, %v1014
    %v1016 = vpop.f32.mrf.mxu0
    %v1017 = vadd.f32 %v968, %v1016
    %1018 = vmatmul.bf16.gmra.mxu0 %v830
    %v1019 = vpop.f32.mrf.mxu0
    %v1020 = vadd.f32 %v971, %v1019
    %v1021 = vpop.f32.mrf.mxu0
    %v1022 = vadd.f32 %v973, %v1021
    %1023 = vmatmul.bf16.gmra.mxu0 %v831
    %v1024 = vpop.f32.mrf.mxu0
    %v1025 = vadd.f32 %v976, %v1024
    %v1026 = vpop.f32.mrf.mxu0
    %v1027 = vadd.f32 %v978, %v1026
    %1028 = vmatmul.bf16.gmra.mxu0 %v832
    %v1029 = vpop.f32.mrf.mxu0
    %v1030 = vadd.f32 %v981, %v1029
    %v1031 = vpop.f32.mrf.mxu0
    %v1032 = vadd.f32 %v983, %v1031
    %1033 = vmatmul.bf16.gmra.mxu0 %v833
    %v1034 = vpop.f32.mrf.mxu0
    %v1035 = vadd.f32 %v986, %v1034
    %v1036 = vpop.f32.mrf.mxu0
    %v1037 = vadd.f32 %v988, %v1036
    %1038 = vdwg.mxu0
    %v1039 = vmax.f32 %v1000, 0.0
    %v1040 = vmax.f32 %v1002, 0.0
    %v1041 = vmax.f32 %v1005, 0.0
    %v1042 = vmax.f32 %v1007, 0.0
    %v1043 = vmax.f32 %v1010, 0.0
    %v1044 = vmax.f32 %v1012, 0.0
    %v1045 = vmax.f32 %v1015, 0.0
    %v1046 = vmax.f32 %v1017, 0.0
    %v1047 = vmax.f32 %v1020, 0.0
    %v1048 = vmax.f32 %v1022, 0.0
    %v1049 = vmax.f32 %v1025, 0.0
    %v1050 = vmax.f32 %v1027, 0.0
    %v1051 = vmax.f32 %v1030, 0.0
    %v1052 = vmax.f32 %v1032, 0.0
    %v1053 = vmax.f32 %v1035, 0.0
    %v1054 = vmax.f32 %v1037, 0.0
    %v1055 = vld [vmem:[#allocation7] sm:$0xff]
    %v1056 = vld [vmem:[#allocation7 + $0x8] sm:$0xff]
    %v1057 = vld [vmem:[#allocation7 + $0x10] sm:$0xff]
    %v1058 = vld [vmem:[#allocation7 + $0x18] sm:$0xff]
    %v1059 = vld [vmem:[#allocation7 + $0x20] sm:$0xff]
    %v1060 = vld [vmem:[#allocation7 + $0x28] sm:$0xff]
    %v1061 = vld [vmem:[#allocation7 + $0x30] sm:$0xff]
    %v1062 = vld [vmem:[#allocation7 + $0x38] sm:$0xff]
    %v1063 = vld [vmem:[#allocation7 + $0x40] sm:$0xff]
    %v1064 = vld [vmem:[#allocation7 + $0x48] sm:$0xff]
    %v1065 = vld [vmem:[#allocation7 + $0x50] sm:$0xff]
    %v1066 = vld [vmem:[#allocation7 + $0x58] sm:$0xff]
    %v1067 = vld [vmem:[#allocation7 + $0x60] sm:$0xff]
    %v1068 = vld [vmem:[#allocation7 + $0x68] sm:$0xff]
    %v1069 = vld [vmem:[#allocation7 + $0x70] sm:$0xff]
    %v1070 = vld [vmem:[#allocation7 + $0x78] sm:$0xff]
    %v1071 = vpack.c.bf16 %v1056, %v1055
    %v1072 = vpack.c.bf16 %v1058, %v1057
    %v1073 = vpack.c.bf16 %v1060, %v1059
    %v1074 = vpack.c.bf16 %v1062, %v1061
    %v1075 = vpack.c.bf16 %v1064, %v1063
    %v1076 = vpack.c.bf16 %v1066, %v1065
    %v1077 = vpack.c.bf16 %v1068, %v1067
    %v1078 = vpack.c.bf16 %v1070, %v1069
    %v1079 = vld [vmem:[#allocation13] sm:$0xf]
    %v1080 = vld [vmem:[#allocation13 + $0x4] sm:$0xf]
    %v1081 = vld [vmem:[#allocation13 + $0x8] sm:$0xf]
    %v1082 = vld [vmem:[#allocation13 + $0xc] sm:$0xf]
    %v1083 = vld [vmem:[#allocation13 + $0x10] sm:$0xf]
    %v1084 = vld [vmem:[#allocation13 + $0x14] sm:$0xf]
    %v1085 = vld [vmem:[#allocation13 + $0x18] sm:$0xf]
    %v1086 = vld [vmem:[#allocation13 + $0x1c] sm:$0xf]
    %v1087 = vld [vmem:[#allocation13 + $0x20] sm:$0xf]
    %v1088 = vld [vmem:[#allocation13 + $0x24] sm:$0xf]
    %v1089 = vld [vmem:[#allocation13 + $0x28] sm:$0xf]
    %v1090 = vld [vmem:[#allocation13 + $0x2c] sm:$0xf]
    %v1091 = vld [vmem:[#allocation13 + $0x30] sm:$0xf]
    %v1092 = vld [vmem:[#allocation13 + $0x34] sm:$0xf]
    %v1093 = vld [vmem:[#allocation13 + $0x38] sm:$0xf]
    %v1094 = vld [vmem:[#allocation13 + $0x3c] sm:$0xf]
    %v1095 = vld [vmem:[#allocation13 + $0x40] sm:$0xf]
    %v1096 = vld [vmem:[#allocation13 + $0x44] sm:$0xf]
    %v1097 = vld [vmem:[#allocation13 + $0x48] sm:$0xf]
    %v1098 = vld [vmem:[#allocation13 + $0x4c] sm:$0xf]
    %v1099 = vld [vmem:[#allocation13 + $0x50] sm:$0xf]
    %v1100 = vld [vmem:[#allocation13 + $0x54] sm:$0xf]
    %v1101 = vld [vmem:[#allocation13 + $0x58] sm:$0xf]
    %v1102 = vld [vmem:[#allocation13 + $0x5c] sm:$0xf]
    %v1103 = vld [vmem:[#allocation13 + $0x60] sm:$0xf]
    %v1104 = vld [vmem:[#allocation13 + $0x64] sm:$0xf]
    %v1105 = vld [vmem:[#allocation13 + $0x68] sm:$0xf]
    %v1106 = vld [vmem:[#allocation13 + $0x6c] sm:$0xf]
    %v1107 = vld [vmem:[#allocation13 + $0x70] sm:$0xf]
    %v1108 = vld [vmem:[#allocation13 + $0x74] sm:$0xf]
    %v1109 = vld [vmem:[#allocation13 + $0x78] sm:$0xf]
    %v1110 = vld [vmem:[#allocation13 + $0x7c] sm:$0xf]
    %v1111 = vld [vmem:[%s9] sm:$0x1]
    %v1112 = vpack.c.bf16 %v1039, %v1039
    %v1113 = vpack.c.bf16 %v1040, %v1040
    %v1114 = vpack.c.bf16 %v1041, %v1041
    %v1115 = vpack.c.bf16 %v1042, %v1042
    %v1116 = vpack.c.bf16 %v1043, %v1043
    %v1117 = vpack.c.bf16 %v1044, %v1044
    %v1118 = vpack.c.bf16 %v1045, %v1045
    %v1119 = vpack.c.bf16 %v1046, %v1046
    %v1120 = vpack.c.bf16 %v1047, %v1047
    %v1121 = vpack.c.bf16 %v1048, %v1048
    %v1122 = vpack.c.bf16 %v1049, %v1049
    %v1123 = vpack.c.bf16 %v1050, %v1050
    %v1124 = vpack.c.bf16 %v1051, %v1051
    %v1125 = vpack.c.bf16 %v1052, %v1052
    %v1126 = vpack.c.bf16 %v1053, %v1053
    %v1127 = vpack.c.bf16 %v1054, %v1054
    %v1144 = vunpack.c.l.b16 %v1112
    %v1145 = vunpack.c.l.b16 %v1113
    %v1146 = vunpack.c.l.b16 %v1114
    %v1147 = vunpack.c.l.b16 %v1115
    %v1148 = vunpack.c.l.b16 %v1116
    %v1149 = vunpack.c.l.b16 %v1117
    %v1150 = vunpack.c.l.b16 %v1118
    %v1151 = vunpack.c.l.b16 %v1119
    %v1152 = vunpack.c.l.b16 %v1120
    %v1153 = vunpack.c.l.b16 %v1121
    %v1154 = vunpack.c.l.b16 %v1122
    %v1155 = vunpack.c.l.b16 %v1123
    %v1156 = vunpack.c.l.b16 %v1124
    %v1157 = vunpack.c.l.b16 %v1125
    %v1158 = vunpack.c.l.b16 %v1126
    %v1159 = vunpack.c.l.b16 %v1127
    %v1160 = vpack.c.b16 %v1145, %v1144
    %v1161 = vpack.c.b16 %v1147, %v1146
    %v1162 = vpack.c.b16 %v1149, %v1148
    %v1163 = vpack.c.b16 %v1151, %v1150
    %v1164 = vpack.c.b16 %v1153, %v1152
    %v1165 = vpack.c.b16 %v1155, %v1154
    %v1166 = vpack.c.b16 %v1157, %v1156
    %v1167 = vpack.c.b16 %v1159, %v1158
    %1176 = vmatpush.bf16.msra.mxu0 %v1167
    %1177 = vmatpush.bf16.msra.mxu0 %v1166
    %1178 = vmatpush.bf16.msra.mxu0 %v1165
    %1179 = vmatpush.bf16.msra.mxu0 %v1164
    %1180 = vmatpush.bf16.msra.mxu0 %v1163
    %1181 = vmatpush.bf16.msra.mxu0 %v1162
    %1182 = vmatpush.bf16.msra.mxu0 %v1161
    %1183 = vmatpush.bf16.msra.mxu0 %v1160
    %1184 = vmatmul.bf16.gmra.mxu0 %v1071
    %v1185 = vpop.f32.mrf.mxu0
    %v1186 = vadd.f32 0.0, %v1185
    %v1187 = vpop.f32.mrf.mxu0
    %v1188 = vadd.f32 0.0, %v1187
    %1189 = vmatmul.bf16.gmra.mxu0 %v1072
    %v1190 = vpop.f32.mrf.mxu0
    %v1191 = vadd.f32 0.0, %v1190
    %v1192 = vpop.f32.mrf.mxu0
    %v1193 = vadd.f32 0.0, %v1192
    %1194 = vmatmul.bf16.gmra.mxu0 %v1073
    %v1195 = vpop.f32.mrf.mxu0
    %v1196 = vadd.f32 0.0, %v1195
    %v1197 = vpop.f32.mrf.mxu0
    %v1198 = vadd.f32 0.0, %v1197
    %1199 = vmatmul.bf16.gmra.mxu0 %v1074
    %v1200 = vpop.f32.mrf.mxu0
    %v1201 = vadd.f32 0.0, %v1200
    %v1202 = vpop.f32.mrf.mxu0
    %v1203 = vadd.f32 0.0, %v1202
    %1204 = vmatmul.bf16.gmra.mxu0 %v1075
    %v1205 = vpop.f32.mrf.mxu0
    %v1206 = vadd.f32 0.0, %v1205
    %v1207 = vpop.f32.mrf.mxu0
    %v1208 = vadd.f32 0.0, %v1207
    %1209 = vmatmul.bf16.gmra.mxu0 %v1076
    %v1210 = vpop.f32.mrf.mxu0
    %v1211 = vadd.f32 0.0, %v1210
    %v1212 = vpop.f32.mrf.mxu0
    %v1213 = vadd.f32 0.0, %v1212
    %1214 = vmatmul.bf16.gmra.mxu0 %v1077
    %v1215 = vpop.f32.mrf.mxu0
    %v1216 = vadd.f32 0.0, %v1215
    %v1217 = vpop.f32.mrf.mxu0
    %v1218 = vadd.f32 0.0, %v1217
    %1219 = vmatmul.bf16.gmra.mxu0 %v1078
    %v1220 = vpop.f32.mrf.mxu0
    %v1221 = vadd.f32 0.0, %v1220
    %v1222 = vpop.f32.mrf.mxu0
    %v1223 = vadd.f32 0.0, %v1222
    %1224 = vdwg.mxu0
    %v1225 = vpack.c.bf16 %v1186, %v1186
    %v1226 = vpack.c.bf16 %v1188, %v1188
    %v1227 = vpack.c.bf16 %v1191, %v1191
    %v1228 = vpack.c.bf16 %v1193, %v1193
    %v1229 = vpack.c.bf16 %v1196, %v1196
    %v1230 = vpack.c.bf16 %v1198, %v1198
    %v1231 = vpack.c.bf16 %v1201, %v1201
    %v1232 = vpack.c.bf16 %v1203, %v1203
    %v1233 = vpack.c.bf16 %v1206, %v1206
    %v1234 = vpack.c.bf16 %v1208, %v1208
    %v1235 = vpack.c.bf16 %v1211, %v1211
    %v1236 = vpack.c.bf16 %v1213, %v1213
    %v1237 = vpack.c.bf16 %v1216, %v1216
    %v1238 = vpack.c.bf16 %v1218, %v1218
    %v1239 = vpack.c.bf16 %v1221, %v1221
    %v1240 = vpack.c.bf16 %v1223, %v1223
    %v1257 = vunpack.c.l.b16 %v1225
    %v1258 = vunpack.c.l.b16 %v1226
    %v1259 = vunpack.c.l.b16 %v1227
    %v1260 = vunpack.c.l.b16 %v1228
    %v1261 = vunpack.c.l.b16 %v1229
    %v1262 = vunpack.c.l.b16 %v1230
    %v1263 = vunpack.c.l.b16 %v1231
    %v1264 = vunpack.c.l.b16 %v1232
    %v1265 = vunpack.c.l.b16 %v1233
    %v1266 = vunpack.c.l.b16 %v1234
    %v1267 = vunpack.c.l.b16 %v1235
    %v1268 = vunpack.c.l.b16 %v1236
    %v1269 = vunpack.c.l.b16 %v1237
    %v1270 = vunpack.c.l.b16 %v1238
    %v1271 = vunpack.c.l.b16 %v1239
    %v1272 = vunpack.c.l.b16 %v1240
    %v1273 = vpack.c.b16 %v1258, %v1257
    %v1274 = vpack.c.b16 %v1260, %v1259
    %v1275 = vpack.c.b16 %v1262, %v1261
    %v1276 = vpack.c.b16 %v1264, %v1263
    %v1277 = vpack.c.b16 %v1266, %v1265
    %v1278 = vpack.c.b16 %v1268, %v1267
    %v1279 = vpack.c.b16 %v1270, %v1269
    %v1280 = vpack.c.b16 %v1272, %v1271
    %v1290 = vperm.slane %v1111, 0
    %v1324 = vunpack.c.l.b16 %v1079
    %v1325 = vunpack.c.l.b16 %v1080
    %v1326 = vunpack.c.l.b16 %v1081
    %v1327 = vunpack.c.l.b16 %v1082
    %v1328 = vunpack.c.l.b16 %v1083
    %v1329 = vunpack.c.l.b16 %v1084
    %v1330 = vunpack.c.l.b16 %v1085
    %v1331 = vunpack.c.l.b16 %v1086
    %v1332 = vunpack.c.l.b16 %v1087
    %v1333 = vunpack.c.l.b16 %v1088
    %v1334 = vunpack.c.l.b16 %v1089
    %v1335 = vunpack.c.l.b16 %v1090
    %v1336 = vunpack.c.l.b16 %v1091
    %v1337 = vunpack.c.l.b16 %v1092
    %v1338 = vunpack.c.l.b16 %v1093
    %v1339 = vunpack.c.l.b16 %v1094
    %v1340 = vunpack.c.l.b16 %v1095
    %v1341 = vunpack.c.l.b16 %v1096
    %v1342 = vunpack.c.l.b16 %v1097
    %v1343 = vunpack.c.l.b16 %v1098
    %v1344 = vunpack.c.l.b16 %v1099
    %v1345 = vunpack.c.l.b16 %v1100
    %v1346 = vunpack.c.l.b16 %v1101
    %v1347 = vunpack.c.l.b16 %v1102
    %v1348 = vunpack.c.l.b16 %v1103
    %v1349 = vunpack.c.l.b16 %v1104
    %v1350 = vunpack.c.l.b16 %v1105
    %v1351 = vunpack.c.l.b16 %v1106
    %v1352 = vunpack.c.l.b16 %v1107
    %v1353 = vunpack.c.l.b16 %v1108
    %v1354 = vunpack.c.l.b16 %v1109
    %v1355 = vunpack.c.l.b16 %v1110
    %v1356 = vpack.c.b16 %v1325, %v1324
    %v1357 = vpack.c.b16 %v1327, %v1326
    %v1358 = vpack.c.b16 %v1329, %v1328
    %v1359 = vpack.c.b16 %v1331, %v1330
    %v1360 = vpack.c.b16 %v1333, %v1332
    %v1361 = vpack.c.b16 %v1335, %v1334
    %v1362 = vpack.c.b16 %v1337, %v1336
    %v1363 = vpack.c.b16 %v1339, %v1338
    %v1364 = vpack.c.b16 %v1341, %v1340
    %v1365 = vpack.c.b16 %v1343, %v1342
    %v1366 = vpack.c.b16 %v1345, %v1344
    %v1367 = vpack.c.b16 %v1347, %v1346
    %v1368 = vpack.c.b16 %v1349, %v1348
    %v1369 = vpack.c.b16 %v1351, %v1350
    %v1370 = vpack.c.b16 %v1353, %v1352
    %v1371 = vpack.c.b16 %v1355, %v1354
    %1388 = vmatpush.bf16.msra.mxu0 %v1363
    %1389 = vmatpush.bf16.msra.mxu0 %v1362
    %1390 = vmatpush.bf16.msra.mxu0 %v1361
    %1391 = vmatpush.bf16.msra.mxu0 %v1360
    %1392 = vmatpush.bf16.msra.mxu0 %v1359
    %1393 = vmatpush.bf16.msra.mxu0 %v1358
    %1394 = vmatpush.bf16.msra.mxu0 %v1357
    %1395 = vmatpush.bf16.msra.mxu0 %v1356
    %1396 = vmatmul.bf16.gmra.mxu0 %v1160
    %v1397 = vpop.f32.mrf.mxu0
    %v1398 = vadd.f32 %v1290, %v1397
    %v1399 = vpop.f32.mrf.mxu0
    %v1400 = vadd.f32 %v1290, %v1399
    %1401 = vmatmul.bf16.gmra.mxu0 %v1161
    %v1402 = vpop.f32.mrf.mxu0
    %v1403 = vadd.f32 %v1290, %v1402
    %v1404 = vpop.f32.mrf.mxu0
    %v1405 = vadd.f32 %v1290, %v1404
    %1406 = vmatmul.bf16.gmra.mxu0 %v1162
    %v1407 = vpop.f32.mrf.mxu0
    %v1408 = vadd.f32 %v1290, %v1407
    %v1409 = vpop.f32.mrf.mxu0
    %v1410 = vadd.f32 %v1290, %v1409
    %1411 = vmatmul.bf16.gmra.mxu0 %v1163
    %v1412 = vpop.f32.mrf.mxu0
    %v1413 = vadd.f32 %v1290, %v1412
    %v1414 = vpop.f32.mrf.mxu0
    %v1415 = vadd.f32 %v1290, %v1414
    %1416 = vmatmul.bf16.gmra.mxu0 %v1164
    %v1417 = vpop.f32.mrf.mxu0
    %v1418 = vadd.f32 %v1290, %v1417
    %v1419 = vpop.f32.mrf.mxu0
    %v1420 = vadd.f32 %v1290, %v1419
    %1421 = vmatmul.bf16.gmra.mxu0 %v1165
    %v1422 = vpop.f32.mrf.mxu0
    %v1423 = vadd.f32 %v1290, %v1422
    %v1424 = vpop.f32.mrf.mxu0
    %v1425 = vadd.f32 %v1290, %v1424
    %1426 = vmatmul.bf16.gmra.mxu0 %v1166
    %v1427 = vpop.f32.mrf.mxu0
    %v1428 = vadd.f32 %v1290, %v1427
    %v1429 = vpop.f32.mrf.mxu0
    %v1430 = vadd.f32 %v1290, %v1429
    %1431 = vmatmul.bf16.gmra.mxu0 %v1167
    %v1432 = vpop.f32.mrf.mxu0
    %v1433 = vadd.f32 %v1290, %v1432
    %v1434 = vpop.f32.mrf.mxu0
    %v1435 = vadd.f32 %v1290, %v1434
    %1436 = vdwg.mxu0
    %1437 = vmatpush.bf16.msra.mxu0 %v1371
    %1438 = vmatpush.bf16.msra.mxu0 %v1370
    %1439 = vmatpush.bf16.msra.mxu0 %v1369
    %1440 = vmatpush.bf16.msra.mxu0 %v1368
    %1441 = vmatpush.bf16.msra.mxu0 %v1367
    %1442 = vmatpush.bf16.msra.mxu0 %v1366
    %1443 = vmatpush.bf16.msra.mxu0 %v1365
    %1444 = vmatpush.bf16.msra.mxu0 %v1364
    %1445 = vmatmul.bf16.gmra.mxu0 %v1273
    %v1446 = vpop.f32.mrf.mxu0
    %v1447 = vadd.f32 %v1398, %v1446
    %v1448 = vpop.f32.mrf.mxu0
    %v1449 = vadd.f32 %v1400, %v1448
    %1450 = vmatmul.bf16.gmra.mxu0 %v1274
    %v1451 = vpop.f32.mrf.mxu0
    %v1452 = vadd.f32 %v1403, %v1451
    %v1453 = vpop.f32.mrf.mxu0
    %v1454 = vadd.f32 %v1405, %v1453
    %1455 = vmatmul.bf16.gmra.mxu0 %v1275
    %v1456 = vpop.f32.mrf.mxu0
    %v1457 = vadd.f32 %v1408, %v1456
    %v1458 = vpop.f32.mrf.mxu0
    %v1459 = vadd.f32 %v1410, %v1458
    %1460 = vmatmul.bf16.gmra.mxu0 %v1276
    %v1461 = vpop.f32.mrf.mxu0
    %v1462 = vadd.f32 %v1413, %v1461
    %v1463 = vpop.f32.mrf.mxu0
    %v1464 = vadd.f32 %v1415, %v1463
    %1465 = vmatmul.bf16.gmra.mxu0 %v1277
    %v1466 = vpop.f32.mrf.mxu0
    %v1467 = vadd.f32 %v1418, %v1466
    %v1468 = vpop.f32.mrf.mxu0
    %v1469 = vadd.f32 %v1420, %v1468
    %1470 = vmatmul.bf16.gmra.mxu0 %v1278
    %v1471 = vpop.f32.mrf.mxu0
    %v1472 = vadd.f32 %v1423, %v1471
    %v1473 = vpop.f32.mrf.mxu0
    %v1474 = vadd.f32 %v1425, %v1473
    %1475 = vmatmul.bf16.gmra.mxu0 %v1279
    %v1476 = vpop.f32.mrf.mxu0
    %v1477 = vadd.f32 %v1428, %v1476
    %v1478 = vpop.f32.mrf.mxu0
    %v1479 = vadd.f32 %v1430, %v1478
    %1480 = vmatmul.bf16.gmra.mxu0 %v1280
    %v1481 = vpop.f32.mrf.mxu0
    %v1482 = vadd.f32 %v1433, %v1481
    %v1483 = vpop.f32.mrf.mxu0
    %v1484 = vadd.f32 %v1435, %v1483
    %1485 = vdwg.mxu0
    %1486 = vst [vmem:[#allocation14] sm:$0xff] %v1447
    %1487 = vst [vmem:[#allocation14 + $0x8] sm:$0xff] %v1449
    %1488 = vst [vmem:[#allocation14 + $0x10] sm:$0xff] %v1452
    %1489 = vst [vmem:[#allocation14 + $0x18] sm:$0xff] %v1454
    %1490 = vst [vmem:[#allocation14 + $0x20] sm:$0xff] %v1457
    %1491 = vst [vmem:[#allocation14 + $0x28] sm:$0xff] %v1459
    %1492 = vst [vmem:[#allocation14 + $0x30] sm:$0xff] %v1462
    %1493 = vst [vmem:[#allocation14 + $0x38] sm:$0xff] %v1464
    %1494 = vst [vmem:[#allocation14 + $0x40] sm:$0xff] %v1467
    %1495 = vst [vmem:[#allocation14 + $0x48] sm:$0xff] %v1469
    %1496 = vst [vmem:[#allocation14 + $0x50] sm:$0xff] %v1472
    %1497 = vst [vmem:[#allocation14 + $0x58] sm:$0xff] %v1474
    %1498 = vst [vmem:[#allocation14 + $0x60] sm:$0xff] %v1477
    %1499 = vst [vmem:[#allocation14 + $0x68] sm:$0xff] %v1479
    %1500 = vst [vmem:[#allocation14 + $0x70] sm:$0xff] %v1482
    %1501 = vst [vmem:[#allocation14 + $0x78] sm:$0xff] %v1484
    // Predicated region
    $region70: #{tpu_custom_call.1} parent=1 // pred_check
      _
    $region71: #{tpu_custom_call.1} parent=1 // pred_check_branch
      %1503 = sbr.rel (0) target = $region73
    $region72: #{tpu_custom_call.1} parent=1 // pred_region
      %1505 = vsyncadd [#allocation4], 0
      %s1506 = sshll.u32 [#allocation14], 4
      %s1507 = int_to_ptr.vmem [resolvable:$true] %s1506
      %s1508 = sshll.u32 %s10, 4
      %s1509 = int_to_ptr.hbm [resolvable:$true] %s1508
      %1514 = dma.vmem_to_hbm [thread:$0]  %s1507, 2048, %s1509, [#allocation4], 128, 128, 8
    $region73: #{tpu_custom_call.1} parent=1 // pred_fallthru
      _
    // Predicated region
    $region74: #{tpu_custom_call.1} parent=1 // pred_check
      _
    $region75: #{tpu_custom_call.1} parent=1 // pred_check_branch
      %1516 = sbr.rel (0) target = $region77
    $region76: #{tpu_custom_call.1} parent=1 // pred_region
      %1518 = dma.done [#allocation4], 2048
    $region77: #{tpu_custom_call.1} parent=1 // pred_fallthru
      _
    %1519 = vsyncpa [#allocation3], 1
    %1520 = vsyncpa [#allocation6], 1
    %1521 = vsyncpa [#allocation9], 1
    %1522 = vsyncpa [#allocation12], 1
    %1523 = vsyncpa [#allocation4], 1

</llo_original>
